<compile_context>
chip_gen: v7x
topology: tpu7x:2x2x1
jax: 0.10.0
libtpu: 0.0.40
codegen_flags: <defaults>
</compile_context>

<pallas_src>
import functools
import math

import jax
import jax.numpy as jnp
from jax.experimental import pallas as pl
from jax.experimental.pallas import tpu as pltpu


def _mlp_kernel(x_ref, *refs, n_layers):
    """Fully fused MLP forward for one batch tile.

    refs = (w0, b0, w1, b1, ..., w_{L-1}, b_{L-1}, o_ref)
    Weights are (in, out); biases are (1, out). Semantics match PyTorch `u`:
      h = x @ W0 + b0; for i >= 1: h = tanh(h) @ Wi + bi
    All intermediate activations live in vregs — nothing round-trips HBM.
    """
    o_ref = refs[-1]
    x = x_ref[...]                                   # (TB, in) f32
    for layer in range(n_layers):
        w_ref = refs[2 * layer]
        b_ref = refs[2 * layer + 1]
        if layer > 0:
            x = jnp.tanh(x)                          # EUP, fused in-kernel
        x = jnp.dot(x, w_ref[...],
                    preferred_element_type=jnp.float32) + b_ref[...]
    o_ref[...] = x.astype(o_ref.dtype)               # single (TB, 1) store


def _pick_batch_tile(batch):
    """Largest batch tile that divides B and is a multiple of 8 (f32 sublane).
    Falls back to a single full block for tiny / ragged batches."""
    if batch % 8 != 0:
        return batch
    for tb in (512, 256, 128, 64, 32, 16, 8):
        if batch % tb == 0:
            return tb
    return batch


def u_forward(x, params):
    """Single fused pallas_call for the whole MLP head.

    x: (B, in_size) f32; params: list of (W (in, out), b (1, out)).
    Returns (B, 1) f32.
    """
    B, in_size = x.shape
    n_layers = len(params)
    out_f = params[-1][0].shape[1]                   # always 1 for this module

    tb = _pick_batch_tile(B)
    grid = (B // tb,)

    in_specs = [pl.BlockSpec((tb, in_size), lambda i: (i, 0))]
    flat_wb = []
    for w, b in params:
        # Weights / biases: full untiled blocks, resident across the grid.
        in_specs.append(pl.BlockSpec(w.shape, lambda i: (0, 0)))
        in_specs.append(pl.BlockSpec(b.shape, lambda i: (0, 0)))
        flat_wb.extend([w, b])

    kernel = functools.partial(_mlp_kernel, n_layers=n_layers)
    return pl.pallas_call(
        kernel,
        out_shape=jax.ShapeDtypeStruct((B, out_f), jnp.float32),
        grid=grid,
        in_specs=in_specs,
        out_specs=pl.BlockSpec((tb, out_f), lambda i: (i, 0)),
        compiler_params=pltpu.CompilerParams(
            dimension_semantics=("parallel",)),      # lets v7x use both TCs
    )(x, *flat_wb)


def init_params(key, in_size, layers):
    """Deterministic init mimicking nn.Linear (uniform +-1/sqrt(fan_in)).
    Weights are stored (in, out) so the kernel needs no transpose."""
    sizes = list(layers) + [1]
    params = []
    fan_in = in_size
    for out_f in sizes:
        key, kw, kb = jax.random.split(key, 3)
        bound = 1.0 / math.sqrt(fan_in)
        w = jax.random.uniform(kw, (fan_in, out_f), jnp.float32, -bound, bound)
        b = jax.random.uniform(kb, (1, out_f), jnp.float32, -bound, bound)
        params.append((w, b))
        fan_in = out_f
    return params


def u_reference(x, params):
    """Pure-JAX reference for correctness checking."""
    w, b = params[0]
    x = x @ w + b
    for w, b in params[1:]:
        x = jnp.tanh(x) @ w + b
    return x


if __name__ == "__main__":
    key = jax.random.PRNGKey(0)
    k_x, k_p = jax.random.split(key)

    batch, in_size, hidden = 2, 32, [32, 16]
    x = jax.random.normal(k_x, (batch, in_size), jnp.float32)
    params = init_params(k_p, in_size, hidden)

    out = u_forward(x, params)
    out = jax.block_until_ready(out)

    ref = u_reference(x, params)
    assert out.shape == (batch, 1), out.shape
    assert jnp.allclose(out, ref, atol=1e-5, rtol=1e-5), (out, ref)

    print("KERNEL_OK")
</pallas_src>

<mosaic_0001>
module attributes {stable_mosaic.version = 11 : i64} {
  func.func @_mlp_kernel(%arg0: i32, %arg1: memref<2x32xf32, #tpu.memory_space<vmem>>, %arg2: memref<32x32xf32, #tpu.memory_space<vmem>>, %arg3: memref<1x32xf32, #tpu.memory_space<vmem>>, %arg4: memref<32x16xf32, #tpu.memory_space<vmem>>, %arg5: memref<1x16xf32, #tpu.memory_space<vmem>>, %arg6: memref<16x1xf32, #tpu.memory_space<vmem>>, %arg7: memref<1x1xf32, #tpu.memory_space<vmem>>, %arg8: memref<2x1xf32, #tpu.memory_space<vmem>>) attributes {dimension_semantics = [#tpu.dimension_semantics<parallel>], iteration_bounds = array<i64: 1>, scalar_prefetch = 0 : i64, scratch_operands = 0 : i64, tpu.core_type = #tpu.core_type<tc>, window_params = [{transform_indices = @transform_0, window_bounds = array<i64: 2, 32>}, {pipeline_mode = #tpu.pipeline_mode<synchronous>, transform_indices = @transform_1, window_bounds = array<i64: 32, 32>}, {pipeline_mode = #tpu.pipeline_mode<synchronous>, transform_indices = @transform_2, window_bounds = array<i64: 1, 32>}, {pipeline_mode = #tpu.pipeline_mode<synchronous>, transform_indices = @transform_3, window_bounds = array<i64: 32, 16>}, {pipeline_mode = #tpu.pipeline_mode<synchronous>, transform_indices = @transform_4, window_bounds = array<i64: 1, 16>}, {pipeline_mode = #tpu.pipeline_mode<synchronous>, transform_indices = @transform_5, window_bounds = array<i64: 16, 1>}, {pipeline_mode = #tpu.pipeline_mode<synchronous>, transform_indices = @transform_6, window_bounds = array<i64: 1, 1>}, {transform_indices = @transform_7, window_bounds = array<i64: 2, 1>}]} {
    %c0 = arith.constant 0 : index
    %c0_0 = arith.constant 0 : index
    %0 = vector.load %arg1[%c0, %c0_0] : memref<2x32xf32, #tpu.memory_space<vmem>>, vector<2x32xf32>
    %c0_1 = arith.constant 0 : index
    %c0_2 = arith.constant 0 : index
    %1 = vector.load %arg2[%c0_1, %c0_2] : memref<32x32xf32, #tpu.memory_space<vmem>>, vector<32x32xf32>
    %cst = arith.constant dense<0.000000e+00> : vector<2x32xf32>
    %2 = tpu.matmul %0, %1, %cst {dimension_numbers = #tpu.dot_dimension_numbers<[1], [0], [0], [1], [0, 0, 1, 1], [], []>} : vector<2x32xf32>, vector<32x32xf32>, vector<2x32xf32> -> vector<2x32xf32>
    %c0_3 = arith.constant 0 : index
    %c0_4 = arith.constant 0 : index
    %3 = vector.load %arg3[%c0_3, %c0_4] : memref<1x32xf32, #tpu.memory_space<vmem>>, vector<1x32xf32>
    %4 = vector.broadcast %3 : vector<1x32xf32> to vector<2x32xf32>
    %5 = arith.addf %2, %4 : vector<2x32xf32>
    %6 = math.tanh %5 : vector<2x32xf32>
    %c0_5 = arith.constant 0 : index
    %c0_6 = arith.constant 0 : index
    %7 = vector.load %arg4[%c0_5, %c0_6] : memref<32x16xf32, #tpu.memory_space<vmem>>, vector<32x16xf32>
    %cst_7 = arith.constant dense<0.000000e+00> : vector<2x16xf32>
    %8 = tpu.matmul %6, %7, %cst_7 {dimension_numbers = #tpu.dot_dimension_numbers<[1], [0], [0], [1], [0, 0, 1, 1], [], []>} : vector<2x32xf32>, vector<32x16xf32>, vector<2x16xf32> -> vector<2x16xf32>
    %c0_8 = arith.constant 0 : index
    %c0_9 = arith.constant 0 : index
    %9 = vector.load %arg5[%c0_8, %c0_9] : memref<1x16xf32, #tpu.memory_space<vmem>>, vector<1x16xf32>
    %10 = vector.broadcast %9 : vector<1x16xf32> to vector<2x16xf32>
    %11 = arith.addf %8, %10 : vector<2x16xf32>
    %12 = math.tanh %11 : vector<2x16xf32>
    %c0_10 = arith.constant 0 : index
    %c0_11 = arith.constant 0 : index
    %13 = vector.load %arg6[%c0_10, %c0_11] : memref<16x1xf32, #tpu.memory_space<vmem>>, vector<16x1xf32>
    %cst_12 = arith.constant dense<0.000000e+00> : vector<2x1xf32>
    %14 = tpu.matmul %12, %13, %cst_12 {dimension_numbers = #tpu.dot_dimension_numbers<[1], [0], [0], [1], [0, 0, 1, 1], [], []>} : vector<2x16xf32>, vector<16x1xf32>, vector<2x1xf32> -> vector<2x1xf32>
    %c0_13 = arith.constant 0 : index
    %c0_14 = arith.constant 0 : index
    %15 = vector.load %arg7[%c0_13, %c0_14] : memref<1x1xf32, #tpu.memory_space<vmem>>, vector<1x1xf32>
    %16 = vector.broadcast %15 : vector<1x1xf32> to vector<2x1xf32>
    %17 = arith.addf %14, %16 : vector<2x1xf32>
    %c0_15 = arith.constant 0 : index
    %c0_16 = arith.constant 0 : index
    %18 = vector.load %arg8[%c0_15, %c0_16] : memref<2x1xf32, #tpu.memory_space<vmem>>, vector<2x1xf32>
    tpu.vector_store %arg8[%c0_15, %c0_16], %17 {strides = array<i32>} : memref<2x1xf32, #tpu.memory_space<vmem>>, vector<2x1xf32>,
    return
  }
  func.func @transform_0(%arg0: i32) -> (i32, i32) {
    %c0_i32 = arith.constant 0 : i32
    %c0_i32_0 = arith.constant 0 : i32
    return %arg0, %c0_i32 : i32, i32
  }
  func.func @transform_1(%arg0: i32) -> (i32, i32) {
    %c0_i32 = arith.constant 0 : i32
    %c0_i32_0 = arith.constant 0 : i32
    %c0_i32_1 = arith.constant 0 : i32
    return %c0_i32, %c0_i32_0 : i32, i32
  }
  func.func @transform_2(%arg0: i32) -> (i32, i32) {
    %c0_i32 = arith.constant 0 : i32
    %c0_i32_0 = arith.constant 0 : i32
    %c0_i32_1 = arith.constant 0 : i32
    return %c0_i32, %c0_i32_0 : i32, i32
  }
  func.func @transform_3(%arg0: i32) -> (i32, i32) {
    %c0_i32 = arith.constant 0 : i32
    %c0_i32_0 = arith.constant 0 : i32
    %c0_i32_1 = arith.constant 0 : i32
    return %c0_i32, %c0_i32_0 : i32, i32
  }
  func.func @transform_4(%arg0: i32) -> (i32, i32) {
    %c0_i32 = arith.constant 0 : i32
    %c0_i32_0 = arith.constant 0 : i32
    %c0_i32_1 = arith.constant 0 : i32
    return %c0_i32, %c0_i32_0 : i32, i32
  }
  func.func @transform_5(%arg0: i32) -> (i32, i32) {
    %c0_i32 = arith.constant 0 : i32
    %c0_i32_0 = arith.constant 0 : i32
    %c0_i32_1 = arith.constant 0 : i32
    return %c0_i32, %c0_i32_0 : i32, i32
  }
  func.func @transform_6(%arg0: i32) -> (i32, i32) {
    %c0_i32 = arith.constant 0 : i32
    %c0_i32_0 = arith.constant 0 : i32
    %c0_i32_1 = arith.constant 0 : i32
    return %c0_i32, %c0_i32_0 : i32, i32
  }
  func.func @transform_7(%arg0: i32) -> (i32, i32) {
    %c0_i32 = arith.constant 0 : i32
    %c0_i32_0 = arith.constant 0 : i32
    return %arg0, %c0_i32 : i32, i32
  }
}

</mosaic_0001>

<llo_original>
// kernel: tpu_custom_call.1
$region0: #{tpu_custom_call.1}
  #allocation0 [shape = 'u32[]', space=smem, size = 0x4, offset = 0x4, fixed_abs, tag = 'smem constant byte address 0x4 - core index']
  #allocation1 [shape = 'u32[144,128]{1,0:T(1,128)}', space=vmem, size = 0x12000, scoped, tag = 'internal scratch']
  #allocation2 [shape = 'f32[1,1]{1,0:T(1,128)S(1)}', space=vmem, size = 0x200, scoped, tag = 'scoped memory for tpu_custom_call.1']
  %s0 = inlined_call_operand.vmem [shape: f32[2,32], index: 0, kind: input, shape index: {}]
  %s1 = inlined_call_operand.vmem [shape: f32[32,32], index: 1, kind: input, shape index: {}]
  %s2 = inlined_call_operand.vmem [shape: f32[1,32], index: 2, kind: input, shape index: {}]
  %s3 = inlined_call_operand.vmem [shape: f32[32,16], index: 3, kind: input, shape index: {}]
  %s4 = inlined_call_operand.vmem [shape: f32[1,16], index: 4, kind: input, shape index: {}]
  %s5 = inlined_call_operand.vmem [shape: f32[16,1], index: 5, kind: input, shape index: {}]
  %s6 = inlined_call_operand.<no memory space> [shape: f32[1,1], index: 6, kind: input, shape index: {}]
  %s7 = inlined_call_operand.vmem [shape: f32[2,1], index: 7, kind: output, shape index: {}]
  %s8 = sld [smem:[#allocation0]]
  $region38: #{tpu_custom_call.1} parent=0
    _
  %s10 = ssub.s32 1, %s8
  %s11 = scalar_select 0, %s10, %s8
  %v12 = vstv %s6
  %13 = vst [vmem:[#allocation2] sm:$0x1] %v12
  // Predicated region
  $region2: #{tpu_custom_call.1} parent=0 // pred_check
    _
  $region3: #{tpu_custom_call.1} parent=0 // pred_check_branch
    %15 = sbr.rel (0) target = $region5
  $region4: #{tpu_custom_call.1} parent=0 // pred_region
    _
  $region5: #{tpu_custom_call.1} parent=0 // pred_fallthru
    _
  // Predicated region
  $region6: #{tpu_custom_call.1} parent=0 // pred_check
    _
  $region7: #{tpu_custom_call.1} parent=0 // pred_check_branch
    %17 = sbr.rel (0) target = $region9
  $region8: #{tpu_custom_call.1} parent=0 // pred_region
    _
  $region9: #{tpu_custom_call.1} parent=0 // pred_fallthru
    _
  // Predicated region
  $region10: #{tpu_custom_call.1} parent=0 // pred_check
    _
  $region11: #{tpu_custom_call.1} parent=0 // pred_check_branch
    %19 = sbr.rel (0) target = $region13
  $region12: #{tpu_custom_call.1} parent=0 // pred_region
    _
  $region13: #{tpu_custom_call.1} parent=0 // pred_fallthru
    _
  // Predicated region
  $region14: #{tpu_custom_call.1} parent=0 // pred_check
    _
  $region15: #{tpu_custom_call.1} parent=0 // pred_check_branch
    %21 = sbr.rel (0) target = $region17
  $region16: #{tpu_custom_call.1} parent=0 // pred_region
    _
  $region17: #{tpu_custom_call.1} parent=0 // pred_fallthru
    _
  // Predicated region
  $region18: #{tpu_custom_call.1} parent=0 // pred_check
    _
  $region19: #{tpu_custom_call.1} parent=0 // pred_check_branch
    %23 = sbr.rel (0) target = $region21
  $region20: #{tpu_custom_call.1} parent=0 // pred_region
    _
  $region21: #{tpu_custom_call.1} parent=0 // pred_fallthru
    _
  // Predicated region
  $region22: #{tpu_custom_call.1} parent=0 // pred_check
    _
  $region23: #{tpu_custom_call.1} parent=0 // pred_check_branch
    %25 = sbr.rel (0) target = $region25
  $region24: #{tpu_custom_call.1} parent=0 // pred_region
    _
  $region25: #{tpu_custom_call.1} parent=0 // pred_fallthru
    _
  // Predicated region
  $region26: #{tpu_custom_call.1} parent=0 // pred_check
    _
  $region27: #{tpu_custom_call.1} parent=0 // pred_check_branch
    %27 = sbr.rel (0) target = $region29
  $region28: #{tpu_custom_call.1} parent=0 // pred_region
    _
  $region29: #{tpu_custom_call.1} parent=0 // pred_fallthru
    _
  %v28 = vld [vmem:[%s0] sm:$0x3]
  %v29 = vld [vmem:[%s1] sm:$0xff]
  %v30 = vld [vmem:[%s1 + $0x8] sm:$0xff]
  %v31 = vld [vmem:[%s1 + $0x10] sm:$0xff]
  %v32 = vld [vmem:[%s1 + $0x18] sm:$0xff]
  %v33 = vld [vmem:[%s2] sm:$0x1]
  %v35 = vlaneseq
  %v36 = vshrl.u32 %v35, 7
  %v37 = vsub.s32 0, %v36
  %v38 = vrot.slane %v33, %v37
  %vm40 = vcmask 261120
  %v42 = vsel %vm40, %v28, 0
  %44 = vmatprep.subr.mxu0 0.0
  %45 = vmatpush1.msra.mxu0 %v29
  %46 = vmatprep.subr.mxu0 0.0
  %47 = vmatpush1.msra.mxu0 %v30
  %48 = vmatprep.subr.mxu0 0.0
  %49 = vmatpush1.msra.mxu0 %v31
  %50 = vmatprep.subr.mxu0 0.0
  %51 = vmatpush1.msra.mxu0 %v32
  %52 = vmatprep.subr.mxu0 0.0
  %53 = vmatpush1.msra.mxu0 0.0
  %54 = vmatprep.subr.mxu0 0.0
  %55 = vmatpush1.msra.mxu0 0.0
  %56 = vmatprep.subr.mxu0 0.0
  %57 = vmatpush1.msra.mxu0 0.0
  %58 = vmatprep.subr.mxu0 0.0
  %59 = vmatpush1.msra.mxu0 0.0
  %60 = vmatprep.subr.mxu0 0.0
  %61 = vmatpush1.msra.mxu0 0.0
  %62 = vmatprep.subr.mxu0 0.0
  %63 = vmatpush1.msra.mxu0 0.0
  %64 = vmatprep.subr.mxu0 0.0
  %65 = vmatpush1.msra.mxu0 0.0
  %66 = vmatprep.subr.mxu0 0.0
  %67 = vmatpush1.msra.mxu0 0.0
  %68 = vmatprep.subr.mxu0 0.0
  %69 = vmatpush1.msra.mxu0 0.0
  %70 = vmatprep.subr.mxu0 0.0
  %71 = vmatpush1.msra.mxu0 0.0
  %72 = vmatprep.subr.mxu0 0.0
  %73 = vmatpush1.msra.mxu0 0.0
  %74 = vmatprep.subr.mxu0 0.0
  %75 = vmatpush1.msra.mxu0 0.0
  %76 = vmatprep.subr.mxu0 0.0
  %77 = vmatpush1.msra.mxu0 0.0
  %78 = vmatprep.subr.mxu0 0.0
  %79 = vmatpush1.msra.mxu0 0.0
  %80 = vmatprep.subr.mxu0 0.0
  %81 = vmatpush1.msra.mxu0 0.0
  %82 = vmatprep.subr.mxu0 0.0
  %83 = vmatpush1.msra.mxu0 0.0
  %84 = vmatprep.subr.mxu0 0.0
  %85 = vmatpush1.msra.mxu0 0.0
  %86 = vmatprep.subr.mxu0 0.0
  %87 = vmatpush1.msra.mxu0 0.0
  %88 = vmatprep.subr.mxu0 0.0
  %89 = vmatpush1.msra.mxu0 0.0
  %90 = vmatprep.subr.mxu0 0.0
  %91 = vmatpush1.msra.mxu0 0.0
  %92 = vmatprep.subr.mxu0 0.0
  %93 = vmatpush1.msra.mxu0 0.0
  %94 = vmatprep.subr.mxu0 0.0
  %95 = vmatpush1.msra.mxu0 0.0
  %96 = vmatprep.subr.mxu0 0.0
  %97 = vmatpush1.msra.mxu0 0.0
  %98 = vmatprep.subr.mxu0 0.0
  %99 = vmatpush1.msra.mxu0 0.0
  %100 = vmatprep.subr.mxu0 0.0
  %101 = vmatpush1.msra.mxu0 0.0
  %102 = vmatprep.subr.mxu0 0.0
  %103 = vmatpush1.msra.mxu0 0.0
  %104 = vmatprep.subr.mxu0 0.0
  %105 = vmatpush1.msra.mxu0 0.0
  %106 = vmatprep.subr.mxu0 0.0
  %107 = vmatpush1.msra.mxu0 0.0
  %108 = vmatprep.mubr.f32.mxu0 0.0
  %109 = vmatmul.mubr.f32.gmra.mrb[0].mxu0 %v42
  %v110 = vpop.f32.mrb[0].mxu0
  %v111 = vadd.f32 %v38, %v110
  %v112 = vpop.f32.mrb[0].mxu0
  %113 = vdwg.mxu0
  %v114 = vtanh.pop %v111
  %v115 = vld [vmem:[%s3] sm:$0xff]
  %v116 = vld [vmem:[%s3 + $0x8] sm:$0xff]
  %v117 = vld [vmem:[%s3 + $0x10] sm:$0xff]
  %v118 = vld [vmem:[%s3 + $0x18] sm:$0xff]
  %v119 = vld [vmem:[%s4] sm:$0x1]
  %v121 = vlaneseq
  %v122 = vshrl.u32 %v121, 7
  %v123 = vsub.s32 0, %v122
  %v124 = vrot.slane %v119, %v123
  %v127 = vsel %vm40, %v114, 0
  %129 = vmatprep.subr.mxu0 0.0
  %130 = vmatpush1.msra.mxu0 %v115
  %131 = vmatprep.subr.mxu0 0.0
  %132 = vmatpush1.msra.mxu0 %v116
  %133 = vmatprep.subr.mxu0 0.0
  %134 = vmatpush1.msra.mxu0 %v117
  %135 = vmatprep.subr.mxu0 0.0
  %136 = vmatpush1.msra.mxu0 %v118
  %137 = vmatprep.subr.mxu0 0.0
  %138 = vmatpush1.msra.mxu0 0.0
  %139 = vmatprep.subr.mxu0 0.0
  %140 = vmatpush1.msra.mxu0 0.0
  %141 = vmatprep.subr.mxu0 0.0
  %142 = vmatpush1.msra.mxu0 0.0
  %143 = vmatprep.subr.mxu0 0.0
  %144 = vmatpush1.msra.mxu0 0.0
  %145 = vmatprep.subr.mxu0 0.0
  %146 = vmatpush1.msra.mxu0 0.0
  %147 = vmatprep.subr.mxu0 0.0
  %148 = vmatpush1.msra.mxu0 0.0
  %149 = vmatprep.subr.mxu0 0.0
  %150 = vmatpush1.msra.mxu0 0.0
  %151 = vmatprep.subr.mxu0 0.0
  %152 = vmatpush1.msra.mxu0 0.0
  %153 = vmatprep.subr.mxu0 0.0
  %154 = vmatpush1.msra.mxu0 0.0
  %155 = vmatprep.subr.mxu0 0.0
  %156 = vmatpush1.msra.mxu0 0.0
  %157 = vmatprep.subr.mxu0 0.0
  %158 = vmatpush1.msra.mxu0 0.0
  %159 = vmatprep.subr.mxu0 0.0
  %160 = vmatpush1.msra.mxu0 0.0
  %161 = vmatprep.subr.mxu0 0.0
  %162 = vmatpush1.msra.mxu0 0.0
  %163 = vmatprep.subr.mxu0 0.0
  %164 = vmatpush1.msra.mxu0 0.0
  %165 = vmatprep.subr.mxu0 0.0
  %166 = vmatpush1.msra.mxu0 0.0
  %167 = vmatprep.subr.mxu0 0.0
  %168 = vmatpush1.msra.mxu0 0.0
  %169 = vmatprep.subr.mxu0 0.0
  %170 = vmatpush1.msra.mxu0 0.0
  %171 = vmatprep.subr.mxu0 0.0
  %172 = vmatpush1.msra.mxu0 0.0
  %173 = vmatprep.subr.mxu0 0.0
  %174 = vmatpush1.msra.mxu0 0.0
  %175 = vmatprep.subr.mxu0 0.0
  %176 = vmatpush1.msra.mxu0 0.0
  %177 = vmatprep.subr.mxu0 0.0
  %178 = vmatpush1.msra.mxu0 0.0
  %179 = vmatprep.subr.mxu0 0.0
  %180 = vmatpush1.msra.mxu0 0.0
  %181 = vmatprep.subr.mxu0 0.0
  %182 = vmatpush1.msra.mxu0 0.0
  %183 = vmatprep.subr.mxu0 0.0
  %184 = vmatpush1.msra.mxu0 0.0
  %185 = vmatprep.subr.mxu0 0.0
  %186 = vmatpush1.msra.mxu0 0.0
  %187 = vmatprep.subr.mxu0 0.0
  %188 = vmatpush1.msra.mxu0 0.0
  %189 = vmatprep.subr.mxu0 0.0
  %190 = vmatpush1.msra.mxu0 0.0
  %191 = vmatprep.subr.mxu0 0.0
  %192 = vmatpush1.msra.mxu0 0.0
  %193 = vmatprep.mubr.f32.mxu0 0.0
  %194 = vmatmul.mubr.f32.gmra.mrb[0].mxu0 %v127
  %v195 = vpop.f32.mrb[0].mxu0
  %v196 = vadd.f32 %v124, %v195
  %v197 = vpop.f32.mrb[0].mxu0
  %198 = vdwg.mxu0
  %v199 = vtanh.pop %v196
  %v200 = vld [vmem:[%s5] sm:$0xff]
  %v201 = vld [vmem:[%s5 + $0x8] sm:$0xff]
  %v202 = vld [vmem:[#allocation2] sm:$0x1]
  %v204 = vlaneseq
  %v205 = vshrl.u32 %v204, 7
  %v206 = vsub.s32 0, %v205
  %v207 = vrot.slane %v202, %v206
  %vm209 = vcmask 130048
  %v211 = vsel %vm209, %v199, 0
  %213 = vmatprep.subr.mxu0 0.0
  %214 = vmatpush1.msra.mxu0 %v200
  %215 = vmatprep.subr.mxu0 0.0
  %216 = vmatpush1.msra.mxu0 %v201
  %217 = vmatprep.subr.mxu0 0.0
  %218 = vmatpush1.msra.mxu0 0.0
  %219 = vmatprep.subr.mxu0 0.0
  %220 = vmatpush1.msra.mxu0 0.0
  %221 = vmatprep.subr.mxu0 0.0
  %222 = vmatpush1.msra.mxu0 0.0
  %223 = vmatprep.subr.mxu0 0.0
  %224 = vmatpush1.msra.mxu0 0.0
  %225 = vmatprep.subr.mxu0 0.0
  %226 = vmatpush1.msra.mxu0 0.0
  %227 = vmatprep.subr.mxu0 0.0
  %228 = vmatpush1.msra.mxu0 0.0
  %229 = vmatprep.subr.mxu0 0.0
  %230 = vmatpush1.msra.mxu0 0.0
  %231 = vmatprep.subr.mxu0 0.0
  %232 = vmatpush1.msra.mxu0 0.0
  %233 = vmatprep.subr.mxu0 0.0
  %234 = vmatpush1.msra.mxu0 0.0
  %235 = vmatprep.subr.mxu0 0.0
  %236 = vmatpush1.msra.mxu0 0.0
  %237 = vmatprep.subr.mxu0 0.0
  %238 = vmatpush1.msra.mxu0 0.0
  %239 = vmatprep.subr.mxu0 0.0
  %240 = vmatpush1.msra.mxu0 0.0
  %241 = vmatprep.subr.mxu0 0.0
  %242 = vmatpush1.msra.mxu0 0.0
  %243 = vmatprep.subr.mxu0 0.0
  %244 = vmatpush1.msra.mxu0 0.0
  %245 = vmatprep.subr.mxu0 0.0
  %246 = vmatpush1.msra.mxu0 0.0
  %247 = vmatprep.subr.mxu0 0.0
  %248 = vmatpush1.msra.mxu0 0.0
  %249 = vmatprep.subr.mxu0 0.0
  %250 = vmatpush1.msra.mxu0 0.0
  %251 = vmatprep.subr.mxu0 0.0
  %252 = vmatpush1.msra.mxu0 0.0
  %253 = vmatprep.subr.mxu0 0.0
  %254 = vmatpush1.msra.mxu0 0.0
  %255 = vmatprep.subr.mxu0 0.0
  %256 = vmatpush1.msra.mxu0 0.0
  %257 = vmatprep.subr.mxu0 0.0
  %258 = vmatpush1.msra.mxu0 0.0
  %259 = vmatprep.subr.mxu0 0.0
  %260 = vmatpush1.msra.mxu0 0.0
  %261 = vmatprep.subr.mxu0 0.0
  %262 = vmatpush1.msra.mxu0 0.0
  %263 = vmatprep.subr.mxu0 0.0
  %264 = vmatpush1.msra.mxu0 0.0
  %265 = vmatprep.subr.mxu0 0.0
  %266 = vmatpush1.msra.mxu0 0.0
  %267 = vmatprep.subr.mxu0 0.0
  %268 = vmatpush1.msra.mxu0 0.0
  %269 = vmatprep.subr.mxu0 0.0
  %270 = vmatpush1.msra.mxu0 0.0
  %271 = vmatprep.subr.mxu0 0.0
  %272 = vmatpush1.msra.mxu0 0.0
  %273 = vmatprep.subr.mxu0 0.0
  %274 = vmatpush1.msra.mxu0 0.0
  %275 = vmatprep.subr.mxu0 0.0
  %276 = vmatpush1.msra.mxu0 0.0
  %277 = vmatprep.mubr.f32.mxu0 0.0
  %278 = vmatmul.mubr.f32.gmra.mrb[0].mxu0 %v211
  %v279 = vpop.f32.mrb[0].mxu0
  %v280 = vadd.f32 %v207, %v279
  %v281 = vpop.f32.mrb[0].mxu0
  %282 = vdwg.mxu0
  %vm283 = vcmask 1024
  %284 = vst.msk [vmem:[%s7] sm:$0x3] %vm283, %v280
  // Predicated region
  $region30: #{tpu_custom_call.1} parent=0 // pred_check
    _
  $region31: #{tpu_custom_call.1} parent=0 // pred_check_branch
    %286 = sbr.rel (0) target = $region33
  $region32: #{tpu_custom_call.1} parent=0 // pred_region
    _
  $region33: #{tpu_custom_call.1} parent=0 // pred_fallthru
    _
  // Predicated region
  $region34: #{tpu_custom_call.1} parent=0 // pred_check
    _
  $region35: #{tpu_custom_call.1} parent=0 // pred_check_branch
    %288 = sbr.rel (0) target = $region37
  $region36: #{tpu_custom_call.1} parent=0 // pred_region
    _
  $region37: #{tpu_custom_call.1} parent=0 // pred_fallthru
    _

</llo_original>
